<compile_context>
chip_gen: v6e
topology: v6e:2x2x1
jax: 0.10.0
libtpu: 0.0.40
codegen_flags: <defaults>
</compile_context>

<pallas_src>
import jax
import jax.numpy as jnp
from jax.experimental import pallas as pl
from jax.experimental.pallas import tpu as pltpu

_MIB = 1024 * 1024
_HAS_BUFFERED = hasattr(pl, "Buffered")


def _round_up(x, m):
    return ((x + m - 1) // m) * m


def _vmem_budget_bytes():
    """Returns (usable VMEM budget, physical capacity) in bytes."""
    try:
        cap = int(pltpu.get_tpu_info().vmem_capacity_bytes)
    except Exception:  # older JAX / interpret mode: conservative (v7x-safe)
        cap = 64 * _MIB
    # ~15% headroom for Mosaic-internal scratch: ~54 MiB on v7x, ~108 on v5e/v6e.
    return max(int(cap * 0.85), 32 * _MIB), cap


# -----------------------------------------------------------------------------
# Kernels
# -----------------------------------------------------------------------------
def _ffn_resident_kernel(x_ref, w0_ref, b0_ref, w1_ref, b1_ref, o_ref):
    # (tm, E) @ (E, E) on the MXU with f32 accumulation; bias + ReLU in f32.
    h = jnp.dot(x_ref[...], w0_ref[...], preferred_element_type=jnp.float32)
    h = jnp.maximum(h + b0_ref[...], 0.0)
    y = jnp.dot(h.astype(w1_ref.dtype), w1_ref[...],
                preferred_element_type=jnp.float32)
    o_ref[...] = (y + b1_ref[...]).astype(o_ref.dtype)


def _ffn_hidden_tiled_kernel(x_ref, w0_ref, b0_ref, w1_ref, b1_ref, o_ref,
                             acc_ref):
    # Hidden (reduction) chunks on the trailing grid axis; accumulate into an
    # f32 VMEM scratch, finalize on the last chunk.
    k = pl.program_id(1)

    @pl.when(k == 0)
    def _():
        acc_ref[...] = jnp.zeros_like(acc_ref)

    h = jnp.dot(x_ref[...], w0_ref[...], preferred_element_type=jnp.float32)
    h = jnp.maximum(h + b0_ref[...], 0.0)
    acc_ref[...] += jnp.dot(h.astype(w1_ref.dtype), w1_ref[...],
                            preferred_element_type=jnp.float32)

    @pl.when(k == pl.num_programs(1) - 1)
    def _():
        o_ref[...] = (acc_ref[...] + b1_ref[...]).astype(o_ref.dtype)


# -----------------------------------------------------------------------------
# pallas_call builders
# -----------------------------------------------------------------------------
def _const_spec_1d(shape):
    # Constant block index -> fetched once; single-buffer it when supported.
    if _HAS_BUFFERED:
        return pl.BlockSpec(shape, lambda i: (0, 0),
                            pipeline_mode=pl.Buffered(1))
    return pl.BlockSpec(shape, lambda i: (0, 0))


def _build_resident_call(M_pad, E_pad, tm, out_dtype, vmem_bytes, cost):
    return pl.pallas_call(
        _ffn_resident_kernel,
        out_shape=jax.ShapeDtypeStruct((M_pad, E_pad), out_dtype),
        grid_spec=pltpu.PrefetchScalarGridSpec(
            num_scalar_prefetch=0,
            grid=(M_pad // tm,),
            in_specs=[
                pl.BlockSpec((tm, E_pad), lambda i: (i, 0)),   # x tile
                _const_spec_1d((E_pad, E_pad)),                # W0 (resident)
                _const_spec_1d((1, E_pad)),                    # b0
                _const_spec_1d((E_pad, E_pad)),                # W1 (resident)
                _const_spec_1d((1, E_pad)),                    # b1
            ],
            out_specs=pl.BlockSpec((tm, E_pad), lambda i: (i, 0)),
        ),
        compiler_params=pltpu.CompilerParams(
            dimension_semantics=("parallel",),
            vmem_limit_bytes=vmem_bytes,
        ),
        cost_estimate=cost,
    )


def _build_tiled_call(M_pad, E_pad, tm, tk, out_dtype, vmem_bytes, cost):
    if _HAS_BUFFERED:
        b1_spec = pl.BlockSpec((1, E_pad), lambda i, k: (0, 0),
                               pipeline_mode=pl.Buffered(1))
    else:
        b1_spec = pl.BlockSpec((1, E_pad), lambda i, k: (0, 0))
    return pl.pallas_call(
        _ffn_hidden_tiled_kernel,
        out_shape=jax.ShapeDtypeStruct((M_pad, E_pad), out_dtype),
        grid_spec=pltpu.PrefetchScalarGridSpec(
            num_scalar_prefetch=0,
            grid=(M_pad // tm, E_pad // tk),
            in_specs=[
                pl.BlockSpec((tm, E_pad), lambda i, k: (i, 0)),  # x (held over k)
                pl.BlockSpec((E_pad, tk), lambda i, k: (0, k)),  # W0 hidden chunk
                pl.BlockSpec((1, tk), lambda i, k: (0, k)),      # b0 chunk
                pl.BlockSpec((tk, E_pad), lambda i, k: (k, 0)),  # W1 hidden chunk
                b1_spec,                                          # b1
            ],
            out_specs=pl.BlockSpec((tm, E_pad), lambda i, k: (i, 0)),
            scratch_shapes=[pltpu.VMEM((tm, E_pad), jnp.float32)],
        ),
        compiler_params=pltpu.CompilerParams(
            dimension_semantics=("parallel", "arbitrary"),
            vmem_limit_bytes=vmem_bytes,
        ),
        cost_estimate=cost,
    )


# -----------------------------------------------------------------------------
# VMEM footprint models (bytes)
# -----------------------------------------------------------------------------
def _resident_bytes(E_pad, tm, wbytes, obytes):
    wbufs = 1 if _HAS_BUFFERED else 2
    return (2 * E_pad * E_pad * wbytes * wbufs     # W0, W1
            + 2 * E_pad * 4 * wbufs                # b0, b1 (f32)
            + 2 * tm * E_pad * wbytes              # x tile, double-buffered
            + 2 * tm * E_pad * obytes              # out tile, double-buffered
            + tm * E_pad * 4)                      # f32 intermediate h


def _tiled_bytes(E_pad, tk, tm, wbytes, obytes):
    return (2 * E_pad * tk * wbytes                # W0 chunk, double-buffered
            + 2 * tk * E_pad * wbytes              # W1 chunk, double-buffered
            + 2 * tk * 4 + E_pad * 4               # b0 chunk (dbuf), b1
            + 2 * tm * E_pad * wbytes              # x tile
            + 2 * tm * E_pad * obytes              # out tile
            + tm * E_pad * 4                       # f32 accumulator scratch
            + tm * tk * 4)                         # f32 intermediate h chunk


# -----------------------------------------------------------------------------
# Wrapper
# -----------------------------------------------------------------------------
def _fit_2d(a, rows, cols, dtype):
    """Cast (and zero-pad only if needed) a 2-D array to (rows, cols)/dtype."""
    r, c = a.shape
    if (r, c) == (rows, cols):
        return a if a.dtype == dtype else a.astype(dtype)
    out = jnp.zeros((rows, cols), dtype)
    return out.at[:r, :c].set(a.astype(dtype))


def positionwise_feed_forward(x, w0, b0, w1, b1, *, tm=None, exact=False):
    """y = ReLU(x @ w0 + b0) @ w1 + b1.

    x: (B, S, E); w0, w1: (E, E); b0, b1: (E,).  Returns (B, S, E) in x.dtype.
    exact=False (default) uses the bf16 MXU path (f32 accumulation, bias+ReLU
    in f32); exact=True keeps everything in f32.
    """
    B, S, E = x.shape
    M = B * S
    budget, vmem_cap = _vmem_budget_bytes()

    compute_dtype = jnp.float32 if exact else jnp.bfloat16
    wbytes = jnp.dtype(compute_dtype).itemsize
    out_dtype = x.dtype
    obytes = jnp.dtype(out_dtype).itemsize

    # Lane-dense embedding dim (multiple of 128); for large E round to 256 so
    # the 256-wide MXU (v6e/v7x) has no half-empty tail pass.
    E_pad = _round_up(max(E, 128), 128)
    if E_pad > 256:
        E_pad = _round_up(E_pad, 256)

    # M tile: 512 on 128 MiB parts (v5e/v6e), 256 on v7x-sized VMEM.  Multiple
    # of 16 so bf16 sublane packing stays aligned.
    if tm is None:
        tm = 512 if vmem_cap > 96 * _MIB else 256
    tm_eff = _round_up(min(tm, _round_up(M, 16)), 16)
    # v7x has 2 TensorCores: keep >= 2 steps on the parallel M axis when there
    # is enough work to split across them.
    if vmem_cap <= 80 * _MIB and M > 256 and M <= tm_eff:
        tm_eff = _round_up(pl.cdiv(M, 2), 256)
    M_pad = _round_up(M, tm_eff)

    # ---- choose resident vs hidden-tiled scheme from the VMEM footprint ----
    res_bytes = _resident_bytes(E_pad, tm_eff, wbytes, obytes)
    use_resident = int(res_bytes * 1.25) <= budget

    tk = None
    if not use_resident:
        while True:
            cands = [t for t in range(E_pad - 128, 0, -128) if E_pad % t == 0]
            tk = next(
                (t for t in cands
                 if int(_tiled_bytes(E_pad, t, tm_eff, wbytes, obytes) * 1.25)
                 <= budget),
                None)
            if tk is not None or tm_eff <= 64:
                break
            tm_eff = max(_round_up(tm_eff // 2, 16), 64)   # shrink the M tile
            M_pad = _round_up(M, tm_eff)
        if tk is None:
            tk = 128  # last resort; let Mosaic report VMEM pressure if any
        footprint = _tiled_bytes(E_pad, tk, tm_eff, wbytes, obytes)
    else:
        footprint = res_bytes

    vmem_bytes = int(min(budget, max(footprint * 1.5, 32 * _MIB)))

    cost = pl.CostEstimate(
        flops=2 * 2 * M * E * E,                        # two (M,E)x(E,E) matmuls
        transcendentals=0,
        bytes_accessed=(M * E * wbytes + M * E * obytes
                        + 2 * E * E * wbytes + 2 * E * 4),
    )

    # ---- operand layout (cast to compute dtype; zero-pad only if needed) ----
    # TODO(synk): cache the padded/cast W0/W1/b0/b1 across calls (they are
    # re-laid-out every call here) and handle a ragged last M tile with a
    # masked store instead of padding M when M % tm != 0.
    xf = _fit_2d(x.reshape(M, E), M_pad, E_pad, compute_dtype)
    w0p = _fit_2d(w0, E_pad, E_pad, compute_dtype)
    w1p = _fit_2d(w1, E_pad, E_pad, compute_dtype)
    b0p = _fit_2d(b0.reshape(1, E), 1, E_pad, jnp.float32)
    b1p = _fit_2d(b1.reshape(1, E), 1, E_pad, jnp.float32)

    if use_resident:
        call = _build_resident_call(M_pad, E_pad, tm_eff, out_dtype,
                                    vmem_bytes, cost)
    else:
        call = _build_tiled_call(M_pad, E_pad, tm_eff, tk, out_dtype,
                                 vmem_bytes, cost)
    out_flat = call(xf, w0p, b0p, w1p, b1p)

    if M_pad == M and E_pad == E:
        return out_flat.reshape(B, S, E)
    return out_flat[:M, :E].reshape(B, S, E)


def reference_ffn(x, w0, b0, w1, b1):
    h = jnp.maximum(jnp.matmul(x, w0) + b0, 0.0)
    return jnp.matmul(h, w1) + b1


if __name__ == "__main__":
    B, S, E = 2, 8, 32  # small shapes; EmbeddingLength = 32
    key = jax.random.PRNGKey(0)
    kx, kw0, kb0, kw1, kb1 = jax.random.split(key, 5)

    x = jax.random.normal(kx, (B, S, E), dtype=jnp.float32)
    # Deterministic synthetic parameters (the PyTorch module only fixes shapes).
    w0 = jax.random.normal(kw0, (E, E), dtype=jnp.float32) * 0.1
    b0 = jax.random.normal(kb0, (E,), dtype=jnp.float32) * 0.1
    w1 = jax.random.normal(kw1, (E, E), dtype=jnp.float32) * 0.1
    b1 = jax.random.normal(kb1, (E,), dtype=jnp.float32) * 0.1

    y_ref = reference_ffn(x, w0, b0, w1, b1)

    # Default bf16 MXU path (f32 accumulation, bias+ReLU in f32).
    y = jax.block_until_ready(positionwise_feed_forward(x, w0, b0, w1, b1))
    assert y.shape == (B, S, E)
    assert jnp.allclose(y, y_ref, atol=5e-2, rtol=5e-2), "bf16 path mismatch"

    # Opt-in exact f32 path.
    y_exact = jax.block_until_ready(
        positionwise_feed_forward(x, w0, b0, w1, b1, exact=True))
    assert jnp.allclose(y_exact, y_ref, atol=1e-4, rtol=1e-4), "f32 path mismatch"

    print("KERNEL_OK")
</pallas_src>

<mosaic_0001>
module attributes {stable_mosaic.version = 11 : i64} {
  func.func @_ffn_resident_kernel(%arg0: i32, %arg1: memref<16x128xbf16, #tpu.memory_space<vmem>>, %arg2: memref<128x128xbf16, #tpu.memory_space<vmem>>, %arg3: memref<1x128xf32, #tpu.memory_space<vmem>>, %arg4: memref<128x128xbf16, #tpu.memory_space<vmem>>, %arg5: memref<1x128xf32, #tpu.memory_space<vmem>>, %arg6: memref<16x128xf32, #tpu.memory_space<vmem>>) attributes {dimension_semantics = [#tpu.dimension_semantics<parallel>], iteration_bounds = array<i64: 1>, scalar_prefetch = 0 : i64, scratch_operands = 0 : i64, tpu.core_type = #tpu.core_type<tc>, window_params = [{transform_indices = @transform_0, window_bounds = array<i64: 16, 128>}, {pipeline_mode = #tpu.pipeline_mode<synchronous>, transform_indices = @transform_1, window_bounds = array<i64: 128, 128>}, {pipeline_mode = #tpu.pipeline_mode<synchronous>, transform_indices = @transform_2, window_bounds = array<i64: 1, 128>}, {pipeline_mode = #tpu.pipeline_mode<synchronous>, transform_indices = @transform_3, window_bounds = array<i64: 128, 128>}, {pipeline_mode = #tpu.pipeline_mode<synchronous>, transform_indices = @transform_4, window_bounds = array<i64: 1, 128>}, {transform_indices = @transform_5, window_bounds = array<i64: 16, 128>}]} {
    %c0 = arith.constant 0 : index
    %c0_0 = arith.constant 0 : index
    %0 = vector.load %arg1[%c0, %c0_0] : memref<16x128xbf16, #tpu.memory_space<vmem>>, vector<16x128xbf16>
    %c0_1 = arith.constant 0 : index
    %c0_2 = arith.constant 0 : index
    %1 = vector.load %arg2[%c0_1, %c0_2] : memref<128x128xbf16, #tpu.memory_space<vmem>>, vector<128x128xbf16>
    %cst = arith.constant dense<0.000000e+00> : vector<16x128xf32>
    %2 = tpu.matmul %0, %1, %cst {dimension_numbers = #tpu.dot_dimension_numbers<[1], [0], [0], [1], [0, 0, 1, 1], [], []>} : vector<16x128xbf16>, vector<128x128xbf16>, vector<16x128xf32> -> vector<16x128xf32>
    %c0_3 = arith.constant 0 : index
    %c0_4 = arith.constant 0 : index
    %3 = vector.load %arg3[%c0_3, %c0_4] : memref<1x128xf32, #tpu.memory_space<vmem>>, vector<1x128xf32>
    %4 = vector.broadcast %3 : vector<1x128xf32> to vector<16x128xf32>
    %5 = arith.addf %2, %4 : vector<16x128xf32>
    %cst_5 = arith.constant 0.000000e+00 : f32
    %6 = vector.broadcast %cst_5 : f32 to vector<16x128xf32>
    %7 = arith.maximumf %5, %6 : vector<16x128xf32>
    %8 = arith.truncf %7 : vector<16x128xf32> to vector<16x128xbf16>
    %c0_6 = arith.constant 0 : index
    %c0_7 = arith.constant 0 : index
    %9 = vector.load %arg4[%c0_6, %c0_7] : memref<128x128xbf16, #tpu.memory_space<vmem>>, vector<128x128xbf16>
    %cst_8 = arith.constant dense<0.000000e+00> : vector<16x128xf32>
    %10 = tpu.matmul %8, %9, %cst_8 {dimension_numbers = #tpu.dot_dimension_numbers<[1], [0], [0], [1], [0, 0, 1, 1], [], []>} : vector<16x128xbf16>, vector<128x128xbf16>, vector<16x128xf32> -> vector<16x128xf32>
    %c0_9 = arith.constant 0 : index
    %c0_10 = arith.constant 0 : index
    %11 = vector.load %arg5[%c0_9, %c0_10] : memref<1x128xf32, #tpu.memory_space<vmem>>, vector<1x128xf32>
    %12 = vector.broadcast %11 : vector<1x128xf32> to vector<16x128xf32>
    %13 = arith.addf %10, %12 : vector<16x128xf32>
    %c0_11 = arith.constant 0 : index
    %c0_12 = arith.constant 0 : index
    %14 = vector.load %arg6[%c0_11, %c0_12] : memref<16x128xf32, #tpu.memory_space<vmem>>, vector<16x128xf32>
    tpu.vector_store %arg6[%c0_11, %c0_12], %13 {strides = array<i32>} : memref<16x128xf32, #tpu.memory_space<vmem>>, vector<16x128xf32>,
    return
  }
  func.func @transform_0(%arg0: i32) -> (i32, i32) {
    %c0_i32 = arith.constant 0 : i32
    %c0_i32_0 = arith.constant 0 : i32
    return %arg0, %c0_i32 : i32, i32
  }
  func.func @transform_1(%arg0: i32) -> (i32, i32) {
    %c0_i32 = arith.constant 0 : i32
    %c0_i32_0 = arith.constant 0 : i32
    %c0_i32_1 = arith.constant 0 : i32
    return %c0_i32, %c0_i32_0 : i32, i32
  }
  func.func @transform_2(%arg0: i32) -> (i32, i32) {
    %c0_i32 = arith.constant 0 : i32
    %c0_i32_0 = arith.constant 0 : i32
    %c0_i32_1 = arith.constant 0 : i32
    return %c0_i32, %c0_i32_0 : i32, i32
  }
  func.func @transform_3(%arg0: i32) -> (i32, i32) {
    %c0_i32 = arith.constant 0 : i32
    %c0_i32_0 = arith.constant 0 : i32
    %c0_i32_1 = arith.constant 0 : i32
    return %c0_i32, %c0_i32_0 : i32, i32
  }
  func.func @transform_4(%arg0: i32) -> (i32, i32) {
    %c0_i32 = arith.constant 0 : i32
    %c0_i32_0 = arith.constant 0 : i32
    %c0_i32_1 = arith.constant 0 : i32
    return %c0_i32, %c0_i32_0 : i32, i32
  }
  func.func @transform_5(%arg0: i32) -> (i32, i32) {
    %c0_i32 = arith.constant 0 : i32
    %c0_i32_0 = arith.constant 0 : i32
    return %arg0, %c0_i32 : i32, i32
  }
}

</mosaic_0001>

<llo_original>
// kernel: tpu_custom_call.1
$region0: #{tpu_custom_call.1}
  #allocation0 [shape = 'u32[]', space=smem, size = 0x4, offset = 0x4, fixed_abs, tag = 'smem constant byte address 0x4 - core index']
  #allocation1 [shape = 'u32[144,128]{1,0:T(1,128)}', space=vmem, size = 0x12000, scoped, tag = 'internal scratch']
  %s0 = inlined_call_operand.hbm [shape: bf16[16,128], index: 0, kind: input, shape index: {}]
  %s1 = inlined_call_operand.hbm [shape: bf16[128,128], index: 1, kind: input, shape index: {}]
  %s2 = inlined_call_operand.vmem [shape: f32[1,128], index: 2, kind: input, shape index: {}]
  %s3 = inlined_call_operand.hbm [shape: bf16[128,128], index: 3, kind: input, shape index: {}]
  %s4 = inlined_call_operand.vmem [shape: f32[1,128], index: 4, kind: input, shape index: {}]
  %s5 = inlined_call_operand.hbm [shape: f32[16,128], index: 5, kind: output, shape index: {}]
  %s6 = sld [smem:[#allocation0]]
  $region42: #{tpu_custom_call.1} parent=0
    _
  %s8 = ssub.s32 1, %s6
  %s9 = scalar_select 0, %s8, %s6
  $region1: #{tpu_custom_call.1} parent=0
    #allocation2 [shape = 'u8[4096]{0}', space=vmem, size = 0x1000, scoped, tag = 'input window, operand 0, single buffered']
    #allocation3 [shape = 's32[1]{0}', space=sflag, size = 0x4, scoped, tag = 'scoped memory for tpu_custom_call.1']
    #allocation4 [shape = 's32[1]{0}', space=sflag, size = 0x4, scoped, tag = 'scoped memory for tpu_custom_call.1']
    #allocation5 [shape = 'u8[32768]{0}', space=vmem, size = 0x8000, scoped, tag = 'input window, operand 1, single buffered']
    #allocation6 [shape = 's32[1]{0}', space=sflag, size = 0x4, scoped, tag = 'scoped memory for tpu_custom_call.1']
    #allocation7 [shape = 'u8[32768]{0}', space=vmem, size = 0x8000, scoped, tag = 'input window, operand 3, single buffered']
    #allocation8 [shape = 'u8[8192]{0}', space=vmem, size = 0x2000, scoped, tag = 'output window, operand 0, single buffered']
    %10 = vsyncpa [#allocation3], 0
    %11 = vsyncpa [#allocation6], 0
    %12 = vsyncpa [#allocation4], 0
    // Predicated region
    $region2: #{tpu_custom_call.1} parent=1 // pred_check
      _
    $region3: #{tpu_custom_call.1} parent=1 // pred_check_branch
      %14 = sbr.rel (0) target = $region5
    $region4: #{tpu_custom_call.1} parent=1 // pred_region
      %s16 = ssub.s32 128, 128
      %17 = vsyncadd [#allocation3], %s16
      %s18 = sshll.u32 [#allocation2], 4
      %s19 = int_to_ptr.vmem [resolvable:$true] %s18
      %24 = dma.hbm_to_vmem [thread:$0]  %s0, 128, %s19, [#allocation3], 64, 64, 4
    $region5: #{tpu_custom_call.1} parent=1 // pred_fallthru
      _
    // Predicated region
    $region6: #{tpu_custom_call.1} parent=1 // pred_check
      _
    $region7: #{tpu_custom_call.1} parent=1 // pred_check_branch
      %26 = sbr.rel (0) target = $region9
    $region8: #{tpu_custom_call.1} parent=1 // pred_region
      %s28 = ssub.s32 1024, 1024
      %29 = vsyncadd [#allocation6], %s28
      %s30 = sshll.u32 [#allocation5], 4
      %s31 = int_to_ptr.vmem [resolvable:$true] %s30
      %36 = dma.hbm_to_vmem [thread:$0]  %s1, 1024, %s31, [#allocation6], 64, 64, 4
    $region9: #{tpu_custom_call.1} parent=1 // pred_fallthru
      _
    // Predicated region
    $region10: #{tpu_custom_call.1} parent=1 // pred_check
      _
    $region11: #{tpu_custom_call.1} parent=1 // pred_check_branch
      %38 = sbr.rel (0) target = $region13
    $region12: #{tpu_custom_call.1} parent=1 // pred_region
      _
    $region13: #{tpu_custom_call.1} parent=1 // pred_fallthru
      _
    // Predicated region
    $region14: #{tpu_custom_call.1} parent=1 // pred_check
      _
    $region15: #{tpu_custom_call.1} parent=1 // pred_check_branch
      %40 = sbr.rel (0) target = $region17
    $region16: #{tpu_custom_call.1} parent=1 // pred_region
      %s42 = ssub.s32 1024, 1024
      %43 = vsyncadd [#allocation6], %s42
      %s44 = sshll.u32 [#allocation7], 4
      %s45 = int_to_ptr.vmem [resolvable:$true] %s44
      %50 = dma.hbm_to_vmem [thread:$0]  %s3, 1024, %s45, [#allocation6], 64, 64, 4
    $region17: #{tpu_custom_call.1} parent=1 // pred_fallthru
      _
    // Predicated region
    $region18: #{tpu_custom_call.1} parent=1 // pred_check
      _
    $region19: #{tpu_custom_call.1} parent=1 // pred_check_branch
      %52 = sbr.rel (0) target = $region21
    $region20: #{tpu_custom_call.1} parent=1 // pred_region
      _
    $region21: #{tpu_custom_call.1} parent=1 // pred_fallthru
      _
    // Predicated region
    $region22: #{tpu_custom_call.1} parent=1 // pred_check
      _
    $region23: #{tpu_custom_call.1} parent=1 // pred_check_branch
      %54 = sbr.rel (0) target = $region25
    $region24: #{tpu_custom_call.1} parent=1 // pred_region
      %55 = dma.done [#allocation3], 128
    $region25: #{tpu_custom_call.1} parent=1 // pred_fallthru
      _
    // Predicated region
    $region26: #{tpu_custom_call.1} parent=1 // pred_check
      _
    $region27: #{tpu_custom_call.1} parent=1 // pred_check_branch
      %57 = sbr.rel (0) target = $region29
    $region28: #{tpu_custom_call.1} parent=1 // pred_region
      %58 = dma.done [#allocation6], 1024
    $region29: #{tpu_custom_call.1} parent=1 // pred_fallthru
      _
    // Predicated region
    $region30: #{tpu_custom_call.1} parent=1 // pred_check
      _
    $region31: #{tpu_custom_call.1} parent=1 // pred_check_branch
      %60 = sbr.rel (0) target = $region33
    $region32: #{tpu_custom_call.1} parent=1 // pred_region
      %61 = dma.done [#allocation6], 1024
    $region33: #{tpu_custom_call.1} parent=1 // pred_fallthru
      _
    %v63 = vld [vmem:[#allocation2] sm:$0xf]
    %v64 = vld [vmem:[#allocation2 + $0x4] sm:$0xf]
    %v65 = vld [vmem:[#allocation5] sm:$0xf]
    %v66 = vld [vmem:[#allocation5 + $0x4] sm:$0xf]
    %v67 = vld [vmem:[#allocation5 + $0x8] sm:$0xf]
    %v68 = vld [vmem:[#allocation5 + $0xc] sm:$0xf]
    %v69 = vld [vmem:[#allocation5 + $0x10] sm:$0xf]
    %v70 = vld [vmem:[#allocation5 + $0x14] sm:$0xf]
    %v71 = vld [vmem:[#allocation5 + $0x18] sm:$0xf]
    %v72 = vld [vmem:[#allocation5 + $0x1c] sm:$0xf]
    %v73 = vld [vmem:[#allocation5 + $0x20] sm:$0xf]
    %v74 = vld [vmem:[#allocation5 + $0x24] sm:$0xf]
    %v75 = vld [vmem:[#allocation5 + $0x28] sm:$0xf]
    %v76 = vld [vmem:[#allocation5 + $0x2c] sm:$0xf]
    %v77 = vld [vmem:[#allocation5 + $0x30] sm:$0xf]
    %v78 = vld [vmem:[#allocation5 + $0x34] sm:$0xf]
    %v79 = vld [vmem:[#allocation5 + $0x38] sm:$0xf]
    %v80 = vld [vmem:[#allocation5 + $0x3c] sm:$0xf]
    %v81 = vld [vmem:[%s2] sm:$0x1]
    %v83 = vlaneseq
    %v84 = vshrl.u32 %v83, 7
    %v85 = vsub.s32 0, %v84
    %v86 = vrot.slane %v81, %v85
    %v90 = vunpack.c.l.b16 %v63
    %v91 = vunpack.c.l.b16 %v64
    %v92 = vpack.c.b16 %v91, %v90
    %v110 = vunpack.c.l.b16 %v65
    %v111 = vunpack.c.l.b16 %v66
    %v112 = vunpack.c.l.b16 %v67
    %v113 = vunpack.c.l.b16 %v68
    %v114 = vunpack.c.l.b16 %v69
    %v115 = vunpack.c.l.b16 %v70
    %v116 = vunpack.c.l.b16 %v71
    %v117 = vunpack.c.l.b16 %v72
    %v118 = vunpack.c.l.b16 %v73
    %v119 = vunpack.c.l.b16 %v74
    %v120 = vunpack.c.l.b16 %v75
    %v121 = vunpack.c.l.b16 %v76
    %v122 = vunpack.c.l.b16 %v77
    %v123 = vunpack.c.l.b16 %v78
    %v124 = vunpack.c.l.b16 %v79
    %v125 = vunpack.c.l.b16 %v80
    %v126 = vpack.c.b16 %v111, %v110
    %v127 = vpack.c.b16 %v113, %v112
    %v128 = vpack.c.b16 %v115, %v114
    %v129 = vpack.c.b16 %v117, %v116
    %v130 = vpack.c.b16 %v119, %v118
    %v131 = vpack.c.b16 %v121, %v120
    %v132 = vpack.c.b16 %v123, %v122
    %v133 = vpack.c.b16 %v125, %v124
    %142 = vmatprep.subr.bf16.mxu0 0
    %143 = vmatpush1.bf16.msra.mxu0 %v133
    %144 = vmatprep.subr.bf16.mxu0 0
    %145 = vmatpush1.bf16.msra.mxu0 %v132
    %146 = vmatprep.subr.bf16.mxu0 0
    %147 = vmatpush1.bf16.msra.mxu0 %v131
    %148 = vmatprep.subr.bf16.mxu0 0
    %149 = vmatpush1.bf16.msra.mxu0 %v130
    %150 = vmatprep.subr.bf16.mxu0 0
    %151 = vmatpush1.bf16.msra.mxu0 %v129
    %152 = vmatprep.subr.bf16.mxu0 0
    %153 = vmatpush1.bf16.msra.mxu0 %v128
    %154 = vmatprep.subr.bf16.mxu0 0
    %155 = vmatpush1.bf16.msra.mxu0 %v127
    %156 = vmatprep.subr.bf16.mxu0 0
    %157 = vmatpush1.bf16.msra.mxu0 %v126
    %158 = vmatprep.subr.bf16.mxu0 0
    %159 = vmatpush2.bf16.msra.mxu0 0
    %160 = vmatprep.subr.bf16.mxu0 0
    %161 = vmatpush2.bf16.msra.mxu0 0
    %162 = vmatprep.subr.bf16.mxu0 0
    %163 = vmatpush2.bf16.msra.mxu0 0
    %164 = vmatprep.subr.bf16.mxu0 0
    %165 = vmatpush2.bf16.msra.mxu0 0
    %166 = vmatprep.subr.bf16.mxu0 0
    %167 = vmatpush2.bf16.msra.mxu0 0
    %168 = vmatprep.subr.bf16.mxu0 0
    %169 = vmatpush2.bf16.msra.mxu0 0
    %170 = vmatprep.subr.bf16.mxu0 0
    %171 = vmatpush2.bf16.msra.mxu0 0
    %172 = vmatprep.subr.bf16.mxu0 0
    %173 = vmatpush2.bf16.msra.mxu0 0
    %174 = vmatprep.mubr.bf16.mxu0 0
    %175 = vmatmul.mubr.bf16.gmra.mxu0 %v92
    %v176 = vpop.f32.mrf.mxu0
    %v177 = vadd.f32 %v86, %v176
    %v178 = vpop.f32.mrf.mxu0
    %v179 = vpop.f32.mrf.mxu0
    %v180 = vadd.f32 %v86, %v179
    %v181 = vpop.f32.mrf.mxu0
    %182 = vdwg.mxu0
    %v183 = vmax.f32 %v177, 0.0
    %v184 = vmax.f32 %v180, 0.0
    %v185 = vpack.c.bf16 %v184, %v183
    %v186 = vld [vmem:[#allocation7] sm:$0xf]
    %v187 = vld [vmem:[#allocation7 + $0x4] sm:$0xf]
    %v188 = vld [vmem:[#allocation7 + $0x8] sm:$0xf]
    %v189 = vld [vmem:[#allocation7 + $0xc] sm:$0xf]
    %v190 = vld [vmem:[#allocation7 + $0x10] sm:$0xf]
    %v191 = vld [vmem:[#allocation7 + $0x14] sm:$0xf]
    %v192 = vld [vmem:[#allocation7 + $0x18] sm:$0xf]
    %v193 = vld [vmem:[#allocation7 + $0x1c] sm:$0xf]
    %v194 = vld [vmem:[#allocation7 + $0x20] sm:$0xf]
    %v195 = vld [vmem:[#allocation7 + $0x24] sm:$0xf]
    %v196 = vld [vmem:[#allocation7 + $0x28] sm:$0xf]
    %v197 = vld [vmem:[#allocation7 + $0x2c] sm:$0xf]
    %v198 = vld [vmem:[#allocation7 + $0x30] sm:$0xf]
    %v199 = vld [vmem:[#allocation7 + $0x34] sm:$0xf]
    %v200 = vld [vmem:[#allocation7 + $0x38] sm:$0xf]
    %v201 = vld [vmem:[#allocation7 + $0x3c] sm:$0xf]
    %v202 = vld [vmem:[%s4] sm:$0x1]
    %v204 = vlaneseq
    %v205 = vshrl.u32 %v204, 7
    %v206 = vsub.s32 0, %v205
    %v207 = vrot.slane %v202, %v206
    %v225 = vunpack.c.l.b16 %v186
    %v226 = vunpack.c.l.b16 %v187
    %v227 = vunpack.c.l.b16 %v188
    %v228 = vunpack.c.l.b16 %v189
    %v229 = vunpack.c.l.b16 %v190
    %v230 = vunpack.c.l.b16 %v191
    %v231 = vunpack.c.l.b16 %v192
    %v232 = vunpack.c.l.b16 %v193
    %v233 = vunpack.c.l.b16 %v194
    %v234 = vunpack.c.l.b16 %v195
    %v235 = vunpack.c.l.b16 %v196
    %v236 = vunpack.c.l.b16 %v197
    %v237 = vunpack.c.l.b16 %v198
    %v238 = vunpack.c.l.b16 %v199
    %v239 = vunpack.c.l.b16 %v200
    %v240 = vunpack.c.l.b16 %v201
    %v241 = vpack.c.b16 %v226, %v225
    %v242 = vpack.c.b16 %v228, %v227
    %v243 = vpack.c.b16 %v230, %v229
    %v244 = vpack.c.b16 %v232, %v231
    %v245 = vpack.c.b16 %v234, %v233
    %v246 = vpack.c.b16 %v236, %v235
    %v247 = vpack.c.b16 %v238, %v237
    %v248 = vpack.c.b16 %v240, %v239
    %257 = vmatprep.subr.bf16.mxu0 0
    %258 = vmatpush1.bf16.msra.mxu0 %v248
    %259 = vmatprep.subr.bf16.mxu0 0
    %260 = vmatpush1.bf16.msra.mxu0 %v247
    %261 = vmatprep.subr.bf16.mxu0 0
    %262 = vmatpush1.bf16.msra.mxu0 %v246
    %263 = vmatprep.subr.bf16.mxu0 0
    %264 = vmatpush1.bf16.msra.mxu0 %v245
    %265 = vmatprep.subr.bf16.mxu0 0
    %266 = vmatpush1.bf16.msra.mxu0 %v244
    %267 = vmatprep.subr.bf16.mxu0 0
    %268 = vmatpush1.bf16.msra.mxu0 %v243
    %269 = vmatprep.subr.bf16.mxu0 0
    %270 = vmatpush1.bf16.msra.mxu0 %v242
    %271 = vmatprep.subr.bf16.mxu0 0
    %272 = vmatpush1.bf16.msra.mxu0 %v241
    %273 = vmatprep.subr.bf16.mxu0 0
    %274 = vmatpush2.bf16.msra.mxu0 0
    %275 = vmatprep.subr.bf16.mxu0 0
    %276 = vmatpush2.bf16.msra.mxu0 0
    %277 = vmatprep.subr.bf16.mxu0 0
    %278 = vmatpush2.bf16.msra.mxu0 0
    %279 = vmatprep.subr.bf16.mxu0 0
    %280 = vmatpush2.bf16.msra.mxu0 0
    %281 = vmatprep.subr.bf16.mxu0 0
    %282 = vmatpush2.bf16.msra.mxu0 0
    %283 = vmatprep.subr.bf16.mxu0 0
    %284 = vmatpush2.bf16.msra.mxu0 0
    %285 = vmatprep.subr.bf16.mxu0 0
    %286 = vmatpush2.bf16.msra.mxu0 0
    %287 = vmatprep.subr.bf16.mxu0 0
    %288 = vmatpush2.bf16.msra.mxu0 0
    %289 = vmatprep.mubr.bf16.mxu0 0
    %290 = vmatmul.mubr.bf16.gmra.mxu0 %v185
    %v291 = vpop.f32.mrf.mxu0
    %v292 = vadd.f32 %v207, %v291
    %v293 = vpop.f32.mrf.mxu0
    %v294 = vpop.f32.mrf.mxu0
    %v295 = vadd.f32 %v207, %v294
    %v296 = vpop.f32.mrf.mxu0
    %297 = vdwg.mxu0
    %298 = vst [vmem:[#allocation8] sm:$0xff] %v292
    %299 = vst [vmem:[#allocation8 + $0x8] sm:$0xff] %v295
    // Predicated region
    $region34: #{tpu_custom_call.1} parent=1 // pred_check
      _
    $region35: #{tpu_custom_call.1} parent=1 // pred_check_branch
      %301 = sbr.rel (0) target = $region37
    $region36: #{tpu_custom_call.1} parent=1 // pred_region
      %s303 = ssub.s32 256, 256
      %304 = vsyncadd [#allocation4], %s303
      %s305 = sshll.u32 [#allocation8], 4
      %s306 = int_to_ptr.vmem [resolvable:$true] %s305
      %311 = dma.vmem_to_hbm [thread:$0]  %s306, 256, %s5, [#allocation4], 128, 128, 8
    $region37: #{tpu_custom_call.1} parent=1 // pred_fallthru
      _
    // Predicated region
    $region38: #{tpu_custom_call.1} parent=1 // pred_check
      _
    $region39: #{tpu_custom_call.1} parent=1 // pred_check_branch
      %313 = sbr.rel (0) target = $region41
    $region40: #{tpu_custom_call.1} parent=1 // pred_region
      %314 = dma.done [#allocation4], 256
    $region41: #{tpu_custom_call.1} parent=1 // pred_fallthru
      _
    %315 = vsyncpa [#allocation3], 1
    %316 = vsyncpa [#allocation6], 1
    %317 = vsyncpa [#allocation4], 1

</llo_original>
